<compile_context>
chip_gen: v6e
topology: v6e:2x2x1
jax: 0.10.0
libtpu: 0.0.40
codegen_flags: <defaults>
</compile_context>

<pallas_src>
import jax
import jax.numpy as jnp
from jax.experimental import pallas as pl
from jax.experimental.pallas import tpu as pltpu


def _mlp_base_kernel(x_ref, w1_ref, b1_ref, w2_ref, b2_ref, wcl_ref, bcl_ref,
                     value_ref, actor_ref):
    H = actor_ref.shape[1]
    x = x_ref[...]

    # Fused layer 1: [critic | actor] first Linears + Tanh in one MXU pass.
    h1 = jnp.tanh(
        jnp.dot(x, w1_ref[...], preferred_element_type=jnp.float32) + b1_ref[...])

    # Fused layer 2: block-diagonal weight keeps the two towers independent.
    h2 = jnp.tanh(
        jnp.dot(h1, w2_ref[...], preferred_element_type=jnp.float32) + b2_ref[...])

    hc = h2[:, :H]   # critic tower output  (static, 128-lane aligned slice)
    ha = h2[:, H:]   # actor tower output

    # Critic head on the VPU/XLU (no MXU pass for an N=1 matmul).
    value_ref[...] = (jnp.sum(hc * wcl_ref[...], axis=-1, keepdims=True)
                      + bcl_ref[...])
    actor_ref[...] = ha


def mlp_base_forward(x, fused):
    """Runs the MLPBase forward pass. x: (B, num_inputs) float32.

    `fused` is the output of fuse_params(). Returns (value (B,1), hidden_actor (B,H)).
    """
    B = x.shape[0]
    hidden = fused["w2"].shape[1] // 2

    out_shape = (
        jax.ShapeDtypeStruct((B, 1), jnp.float32),        # critic value
        jax.ShapeDtypeStruct((B, hidden), jnp.float32),   # hidden_actor
    )
    # Problem is tiny: single grid point, whole arrays resident in VMEM, no
    # pipelining machinery (launch/latency bound at this size).
    value, hidden_actor = pl.pallas_call(
        _mlp_base_kernel,
        out_shape=out_shape,
        in_specs=[pl.BlockSpec(memory_space=pltpu.MemorySpace.VMEM)] * 7,
        out_specs=(pl.BlockSpec(memory_space=pltpu.MemorySpace.VMEM),
                   pl.BlockSpec(memory_space=pltpu.MemorySpace.VMEM)),
    )(x, fused["w1"], fused["b1"], fused["w2"], fused["b2"],
      fused["wcl_row"], fused["bcl"])
    return value, hidden_actor


def init_normc(key, in_features, out_features):
    """init_normc_: normal(0,1), then normalize each output row of the (out,in)
    PyTorch weight along the input dim (dim=1). Stored transposed as (in, out)."""
    w = jax.random.normal(key, (out_features, in_features), dtype=jnp.float32)
    w = w / jnp.sqrt(jnp.sum(jnp.square(w), axis=1, keepdims=True))
    return jnp.transpose(w)  # (in, out)


def make_params(key, num_inputs, hidden_size):
    """Unfused parameters matching the PyTorch module layout (transposed weights)."""
    ks = jax.random.split(key, 5)
    return {
        "wa1": init_normc(ks[0], num_inputs, hidden_size),
        "ba1": jnp.zeros((1, hidden_size), jnp.float32),
        "wa2": init_normc(ks[1], hidden_size, hidden_size),
        "ba2": jnp.zeros((1, hidden_size), jnp.float32),
        "wc1": init_normc(ks[2], num_inputs, hidden_size),
        "bc1": jnp.zeros((1, hidden_size), jnp.float32),
        "wc2": init_normc(ks[3], hidden_size, hidden_size),
        "bc2": jnp.zeros((1, hidden_size), jnp.float32),
        "wcl": init_normc(ks[4], hidden_size, 1),          # (hidden, 1)
        "bcl": jnp.zeros((1, 1), jnp.float32),
    }


def fuse_params(params):
    """Host-side weight prep: concat layer-1 weights, block-diagonal layer-2
    weights, critic head as a (1, hidden) row for the in-kernel VPU reduce."""
    H = params["wa1"].shape[1]
    w1 = jnp.concatenate([params["wc1"], params["wa1"]], axis=1)   # (in, 2H)
    b1 = jnp.concatenate([params["bc1"], params["ba1"]], axis=1)   # (1, 2H)

    zeros = jnp.zeros((H, H), jnp.float32)
    w2 = jnp.concatenate(
        [jnp.concatenate([params["wc2"], zeros], axis=1),
         jnp.concatenate([zeros, params["wa2"]], axis=1)], axis=0)  # (2H, 2H)
    b2 = jnp.concatenate([params["bc2"], params["ba2"]], axis=1)    # (1, 2H)

    return {
        "w1": w1, "b1": b1,
        "w2": w2, "b2": b2,
        "wcl_row": jnp.transpose(params["wcl"]),   # (1, hidden)
        "bcl": params["bcl"],                      # (1, 1)
    }


def reference_forward(x, params):
    hc = jnp.tanh(x @ params["wc1"] + params["bc1"])
    hc = jnp.tanh(hc @ params["wc2"] + params["bc2"])
    ha = jnp.tanh(x @ params["wa1"] + params["ba1"])
    ha = jnp.tanh(ha @ params["wa2"] + params["ba2"])
    return hc @ params["wcl"] + params["bcl"], ha


if __name__ == "__main__":
    num_inputs = 32
    hidden_size = 128
    batch = 8

    key = jax.random.PRNGKey(0)
    k_x, k_h, k_p = jax.random.split(key, 3)

    x = jax.random.normal(k_x, (batch, num_inputs), dtype=jnp.float32)
    rnn_hxs = jnp.zeros((batch, 1), jnp.float32)   # non-recurrent: size-1 hidden state
    masks = jnp.ones((batch, 1), jnp.float32)      # unused in non-recurrent path

    params = make_params(k_p, num_inputs, hidden_size)
    fused = fuse_params(params)

    value, hidden_actor = mlp_base_forward(x, fused)
    value = jax.block_until_ready(value)
    hidden_actor = jax.block_until_ready(hidden_actor)

    # rnn_hxs is passed through unchanged (non-recurrent MLPBase)
    out = (value, hidden_actor, rnn_hxs)

    # sanity check against pure-JAX reference (unfused math)
    v_ref, a_ref = reference_forward(x, params)
    assert value.shape == (batch, 1) and hidden_actor.shape == (batch, hidden_size)
    assert jnp.allclose(value, v_ref, atol=1e-5, rtol=1e-5)
    assert jnp.allclose(hidden_actor, a_ref, atol=1e-5, rtol=1e-5)

    print("KERNEL_OK")
</pallas_src>

<mosaic_0001>
module attributes {stable_mosaic.version = 11 : i64} {
  func.func @_mlp_base_kernel(%arg0: memref<8x32xf32, #tpu.memory_space<vmem>>, %arg1: memref<32x256xf32, #tpu.memory_space<vmem>>, %arg2: memref<1x256xf32, #tpu.memory_space<vmem>>, %arg3: memref<256x256xf32, #tpu.memory_space<vmem>>, %arg4: memref<1x256xf32, #tpu.memory_space<vmem>>, %arg5: memref<1x128xf32, #tpu.memory_space<vmem>>, %arg6: memref<1x1xf32, #tpu.memory_space<vmem>>, %arg7: memref<8x1xf32, #tpu.memory_space<vmem>>, %arg8: memref<8x128xf32, #tpu.memory_space<vmem>>) attributes {dimension_semantics = [], scalar_prefetch = 0 : i64, scratch_operands = 0 : i64, tpu.core_type = #tpu.core_type<tc>} {
    %c0 = arith.constant 0 : index
    %c0_0 = arith.constant 0 : index
    %0 = vector.load %arg0[%c0, %c0_0] : memref<8x32xf32, #tpu.memory_space<vmem>>, vector<8x32xf32>
    %c0_1 = arith.constant 0 : index
    %c0_2 = arith.constant 0 : index
    %1 = vector.load %arg1[%c0_1, %c0_2] : memref<32x256xf32, #tpu.memory_space<vmem>>, vector<32x256xf32>
    %cst = arith.constant dense<0.000000e+00> : vector<8x256xf32>
    %2 = tpu.matmul %0, %1, %cst {dimension_numbers = #tpu.dot_dimension_numbers<[1], [0], [0], [1], [0, 0, 1, 1], [], []>} : vector<8x32xf32>, vector<32x256xf32>, vector<8x256xf32> -> vector<8x256xf32>
    %c0_3 = arith.constant 0 : index
    %c0_4 = arith.constant 0 : index
    %3 = vector.load %arg2[%c0_3, %c0_4] : memref<1x256xf32, #tpu.memory_space<vmem>>, vector<1x256xf32>
    %4 = vector.broadcast %3 : vector<1x256xf32> to vector<8x256xf32>
    %5 = arith.addf %2, %4 : vector<8x256xf32>
    %6 = math.tanh %5 : vector<8x256xf32>
    %c0_5 = arith.constant 0 : index
    %c0_6 = arith.constant 0 : index
    %7 = vector.load %arg3[%c0_5, %c0_6] : memref<256x256xf32, #tpu.memory_space<vmem>>, vector<256x256xf32>
    %cst_7 = arith.constant dense<0.000000e+00> : vector<8x256xf32>
    %8 = tpu.matmul %6, %7, %cst_7 {dimension_numbers = #tpu.dot_dimension_numbers<[1], [0], [0], [1], [0, 0, 1, 1], [], []>} : vector<8x256xf32>, vector<256x256xf32>, vector<8x256xf32> -> vector<8x256xf32>
    %c0_8 = arith.constant 0 : index
    %c0_9 = arith.constant 0 : index
    %9 = vector.load %arg4[%c0_8, %c0_9] : memref<1x256xf32, #tpu.memory_space<vmem>>, vector<1x256xf32>
    %10 = vector.broadcast %9 : vector<1x256xf32> to vector<8x256xf32>
    %11 = arith.addf %8, %10 : vector<8x256xf32>
    %12 = math.tanh %11 : vector<8x256xf32>
    %13 = vector.extract_strided_slice %12 {offsets = [0, 0], sizes = [8, 128], strides = [1, 1]} : vector<8x256xf32> to vector<8x128xf32>
    %14 = vector.extract_strided_slice %12 {offsets = [0, 128], sizes = [8, 128], strides = [1, 1]} : vector<8x256xf32> to vector<8x128xf32>
    %c0_10 = arith.constant 0 : index
    %c0_11 = arith.constant 0 : index
    %15 = vector.load %arg5[%c0_10, %c0_11] : memref<1x128xf32, #tpu.memory_space<vmem>>, vector<1x128xf32>
    %16 = vector.broadcast %15 : vector<1x128xf32> to vector<8x128xf32>
    %17 = arith.mulf %13, %16 : vector<8x128xf32>
    %cst_12 = arith.constant dense<0.000000e+00> : vector<8xf32>
    %18 = vector.multi_reduction <add>, %17, %cst_12 [1] : vector<8x128xf32> to vector<8xf32>
    %19 = vector.shape_cast %18 : vector<8xf32> to vector<8x1xf32>
    %c0_13 = arith.constant 0 : index
    %c0_14 = arith.constant 0 : index
    %20 = vector.load %arg6[%c0_13, %c0_14] : memref<1x1xf32, #tpu.memory_space<vmem>>, vector<1x1xf32>
    %21 = vector.broadcast %20 : vector<1x1xf32> to vector<8x1xf32>
    %22 = arith.addf %19, %21 : vector<8x1xf32>
    %c0_15 = arith.constant 0 : index
    %c0_16 = arith.constant 0 : index
    %23 = vector.load %arg7[%c0_15, %c0_16] : memref<8x1xf32, #tpu.memory_space<vmem>>, vector<8x1xf32>
    tpu.vector_store %arg7[%c0_15, %c0_16], %22 {strides = array<i32>} : memref<8x1xf32, #tpu.memory_space<vmem>>, vector<8x1xf32>,
    %c0_17 = arith.constant 0 : index
    %c0_18 = arith.constant 0 : index
    %24 = vector.load %arg8[%c0_17, %c0_18] : memref<8x128xf32, #tpu.memory_space<vmem>>, vector<8x128xf32>
    tpu.vector_store %arg8[%c0_17, %c0_18], %14 {strides = array<i32>} : memref<8x128xf32, #tpu.memory_space<vmem>>, vector<8x128xf32>,
    return
  }
}

</mosaic_0001>

<llo_original>
// kernel: tpu_custom_call.1
$region0: #{tpu_custom_call.1}
  #allocation0 [shape = 'u32[]', space=smem, size = 0x4, offset = 0x4, fixed_abs, tag = 'smem constant byte address 0x4 - core index']
  #allocation1 [shape = 'u32[144,128]{1,0:T(1,128)}', space=vmem, size = 0x12000, scoped, tag = 'internal scratch']
  #allocation2 [shape = 'f32[1,1]{1,0:T(1,128)S(1)}', space=vmem, size = 0x200, scoped, tag = 'scoped memory for tpu_custom_call.1']
  %s0 = inlined_call_operand.hbm [shape: f32[8,32], index: 0, kind: input, shape index: {}]
  %s1 = inlined_call_operand.hbm [shape: f32[32,256], index: 1, kind: input, shape index: {}]
  %s2 = inlined_call_operand.vmem [shape: f32[1,256], index: 2, kind: input, shape index: {}]
  %s3 = inlined_call_operand.hbm [shape: f32[256,256], index: 3, kind: input, shape index: {}]
  %s4 = inlined_call_operand.vmem [shape: f32[1,256], index: 4, kind: input, shape index: {}]
  %s5 = inlined_call_operand.vmem [shape: f32[1,128], index: 5, kind: input, shape index: {}]
  %s6 = inlined_call_operand.<no memory space> [shape: f32[1,1], index: 6, kind: input, shape index: {}]
  %s7 = inlined_call_operand.vmem [shape: f32[8,1], index: 7, kind: output, shape index: {0}]
  %s8 = inlined_call_operand.hbm [shape: f32[8,128], index: 8, kind: output, shape index: {1}]
  %9 = xla_tuple %s7, %s8
  %s10 = sld [smem:[#allocation0]]
  $region58: #{tpu_custom_call.1} parent=0
    _
  %s12 = ssub.s32 1, %s10
  %s13 = scalar_select 0, %s12, %s10
  %v14 = vstv %s6
  %15 = vst [vmem:[#allocation2] sm:$0x1] %v14
  $region1: #{tpu_custom_call.1} parent=0
    #allocation3 [shape = 'u8[4096]{0}', space=vmem, size = 0x1000, scoped, tag = 'input window, operand 0, single buffered']
    #allocation4 [shape = 's32[1]{0}', space=sflag, size = 0x4, scoped, tag = 'scoped memory for tpu_custom_call.1']
    #allocation5 [shape = 's32[1]{0}', space=sflag, size = 0x4, scoped, tag = 'scoped memory for tpu_custom_call.1']
    #allocation6 [shape = 'u8[32768]{0}', space=vmem, size = 0x8000, scoped, tag = 'input window, operand 1, single buffered']
    #allocation7 [shape = 's32[1]{0}', space=sflag, size = 0x4, scoped, tag = 'scoped memory for tpu_custom_call.1']
    #allocation8 [shape = 'u8[262144]{0}', space=vmem, size = 0x40000, scoped, tag = 'input window, operand 3, single buffered']
    #allocation9 [shape = 'u8[4096]{0}', space=vmem, size = 0x1000, scoped, tag = 'output window, operand 1, single buffered']
    %16 = vsyncpa [#allocation4], 0
    %17 = vsyncpa [#allocation7], 0
    %18 = vsyncpa [#allocation5], 0
    // Predicated region
    $region2: #{tpu_custom_call.1} parent=1 // pred_check
      _
    $region3: #{tpu_custom_call.1} parent=1 // pred_check_branch
      %20 = sbr.rel (0) target = $region5
    $region4: #{tpu_custom_call.1} parent=1 // pred_region
      %s22 = ssub.s32 128, 128
      %23 = vsyncadd [#allocation4], %s22
      %s25 = sshll.u32 [#allocation3], 4
      %s26 = int_to_ptr.vmem [resolvable:$true] %s25
      %28 = dma.hbm_to_vmem [thread:$0]  %s0, 128, %s26, [#allocation4]
    $region5: #{tpu_custom_call.1} parent=1 // pred_fallthru
      _
    // Predicated region
    $region6: #{tpu_custom_call.1} parent=1 // pred_check
      _
    $region7: #{tpu_custom_call.1} parent=1 // pred_check_branch
      %30 = sbr.rel (0) target = $region9
    $region8: #{tpu_custom_call.1} parent=1 // pred_region
      %s32 = ssub.s32 1024, 1024
      %33 = vsyncadd [#allocation7], %s32
      %s34 = sshll.u32 [#allocation6], 4
      %s35 = int_to_ptr.vmem [resolvable:$true] %s34
      %40 = dma.hbm_to_vmem [thread:$0]  %s1, 1024, %s35, [#allocation7], 256, 256, 16
    $region9: #{tpu_custom_call.1} parent=1 // pred_fallthru
      _
    // Predicated region
    $region10: #{tpu_custom_call.1} parent=1 // pred_check
      _
    $region11: #{tpu_custom_call.1} parent=1 // pred_check_branch
      %42 = sbr.rel (0) target = $region13
    $region12: #{tpu_custom_call.1} parent=1 // pred_region
      _
    $region13: #{tpu_custom_call.1} parent=1 // pred_fallthru
      _
    // Predicated region
    $region14: #{tpu_custom_call.1} parent=1 // pred_check
      _
    $region15: #{tpu_custom_call.1} parent=1 // pred_check_branch
      %44 = sbr.rel (0) target = $region17
    $region16: #{tpu_custom_call.1} parent=1 // pred_region
      %s46 = ssub.s32 8192, 8192
      %47 = vsyncadd [#allocation7], %s46
      %s48 = sshll.u32 [#allocation8], 4
      %s49 = int_to_ptr.vmem [resolvable:$true] %s48
      %54 = dma.hbm_to_vmem [thread:$0]  %s3, 8192, %s49, [#allocation7], 256, 256, 16
    $region17: #{tpu_custom_call.1} parent=1 // pred_fallthru
      _
    // Predicated region
    $region18: #{tpu_custom_call.1} parent=1 // pred_check
      _
    $region19: #{tpu_custom_call.1} parent=1 // pred_check_branch
      %56 = sbr.rel (0) target = $region21
    $region20: #{tpu_custom_call.1} parent=1 // pred_region
      _
    $region21: #{tpu_custom_call.1} parent=1 // pred_fallthru
      _
    // Predicated region
    $region22: #{tpu_custom_call.1} parent=1 // pred_check
      _
    $region23: #{tpu_custom_call.1} parent=1 // pred_check_branch
      %58 = sbr.rel (0) target = $region25
    $region24: #{tpu_custom_call.1} parent=1 // pred_region
      _
    $region25: #{tpu_custom_call.1} parent=1 // pred_fallthru
      _
    // Predicated region
    $region26: #{tpu_custom_call.1} parent=1 // pred_check
      _
    $region27: #{tpu_custom_call.1} parent=1 // pred_check_branch
      %60 = sbr.rel (0) target = $region29
    $region28: #{tpu_custom_call.1} parent=1 // pred_region
      _
    $region29: #{tpu_custom_call.1} parent=1 // pred_fallthru
      _
    // Predicated region
    $region30: #{tpu_custom_call.1} parent=1 // pred_check
      _
    $region31: #{tpu_custom_call.1} parent=1 // pred_check_branch
      %62 = sbr.rel (0) target = $region33
    $region32: #{tpu_custom_call.1} parent=1 // pred_region
      %63 = dma.done [#allocation4], 128
    $region33: #{tpu_custom_call.1} parent=1 // pred_fallthru
      _
    // Predicated region
    $region34: #{tpu_custom_call.1} parent=1 // pred_check
      _
    $region35: #{tpu_custom_call.1} parent=1 // pred_check_branch
      %65 = sbr.rel (0) target = $region37
    $region36: #{tpu_custom_call.1} parent=1 // pred_region
      %66 = dma.done [#allocation7], 1024
    $region37: #{tpu_custom_call.1} parent=1 // pred_fallthru
      _
    // Predicated region
    $region38: #{tpu_custom_call.1} parent=1 // pred_check
      _
    $region39: #{tpu_custom_call.1} parent=1 // pred_check_branch
      %68 = sbr.rel (0) target = $region41
    $region40: #{tpu_custom_call.1} parent=1 // pred_region
      %69 = dma.done [#allocation7], 8192
    $region41: #{tpu_custom_call.1} parent=1 // pred_fallthru
      _
    %v70 = vld [vmem:[#allocation3] sm:$0xff]
    %v71 = vld [vmem:[#allocation6] sm:$0xff]
    %v72 = vld [vmem:[#allocation6 + $0x8] sm:$0xff]
    %v73 = vld [vmem:[#allocation6 + $0x10] sm:$0xff]
    %v74 = vld [vmem:[#allocation6 + $0x18] sm:$0xff]
    %v75 = vld [vmem:[#allocation6 + $0x20] sm:$0xff]
    %v76 = vld [vmem:[#allocation6 + $0x28] sm:$0xff]
    %v77 = vld [vmem:[#allocation6 + $0x30] sm:$0xff]
    %v78 = vld [vmem:[#allocation6 + $0x38] sm:$0xff]
    %v79 = vld [vmem:[%s2] sm:$0x3]
    %v81 = vlaneseq
    %v82 = vshrl.u32 %v81, 7
    %v83 = vsub.s32 0, %v82
    %v84 = vrot.slane %v79, %v83
    %v85 = vlaneseq
    %v86 = vshrl.u32 %v85, 7
    %v87 = vsub.s32 1, %v86
    %v88 = vrot.slane %v79, %v87
    %vm91 = vcmask 261120
    %v93 = vsel %vm91, %v70, 0
    %95 = vmatprep.subr.mxu0 0.0
    %96 = vmatpush1.msra.mxu0 0.0
    %97 = vmatprep.subr.mxu0 0.0
    %98 = vmatpush1.msra.mxu0 0.0
    %99 = vmatprep.subr.mxu0 0.0
    %100 = vmatpush1.msra.mxu0 0.0
    %101 = vmatprep.subr.mxu0 0.0
    %102 = vmatpush1.msra.mxu0 0.0
    %103 = vmatprep.subr.mxu0 0.0
    %104 = vmatpush1.msra.mxu0 0.0
    %105 = vmatprep.subr.mxu0 0.0
    %106 = vmatpush1.msra.mxu0 0.0
    %107 = vmatprep.subr.mxu0 0.0
    %108 = vmatpush1.msra.mxu0 0.0
    %109 = vmatprep.subr.mxu0 0.0
    %110 = vmatpush1.msra.mxu0 0.0
    %111 = vmatprep.subr.mxu0 0.0
    %112 = vmatpush1.msra.mxu0 0.0
    %113 = vmatprep.subr.mxu0 0.0
    %114 = vmatpush1.msra.mxu0 0.0
    %115 = vmatprep.subr.mxu0 0.0
    %116 = vmatpush1.msra.mxu0 0.0
    %117 = vmatprep.subr.mxu0 0.0
    %118 = vmatpush1.msra.mxu0 0.0
    %119 = vmatprep.subr.mxu0 %v78
    %120 = vmatpush1.msra.mxu0 %v77
    %121 = vmatprep.subr.mxu0 %v76
    %122 = vmatpush1.msra.mxu0 %v75
    %123 = vmatprep.subr.mxu0 %v74
    %124 = vmatpush1.msra.mxu0 %v73
    %125 = vmatprep.subr.mxu0 %v72
    %126 = vmatpush1.msra.mxu0 %v71
    %127 = vmatprep.subr.mxu0 0.0
    %128 = vmatpush2.msra.mxu0 0.0
    %129 = vmatprep.subr.mxu0 0.0
    %130 = vmatpush2.msra.mxu0 0.0
    %131 = vmatprep.subr.mxu0 0.0
    %132 = vmatpush2.msra.mxu0 0.0
    %133 = vmatprep.subr.mxu0 0.0
    %134 = vmatpush2.msra.mxu0 0.0
    %135 = vmatprep.subr.mxu0 0.0
    %136 = vmatpush2.msra.mxu0 0.0
    %137 = vmatprep.subr.mxu0 0.0
    %138 = vmatpush2.msra.mxu0 0.0
    %139 = vmatprep.subr.mxu0 0.0
    %140 = vmatpush2.msra.mxu0 0.0
    %141 = vmatprep.subr.mxu0 0.0
    %142 = vmatpush2.msra.mxu0 0.0
    %143 = vmatprep.subr.mxu0 0.0
    %144 = vmatpush2.msra.mxu0 0.0
    %145 = vmatprep.subr.mxu0 0.0
    %146 = vmatpush2.msra.mxu0 0.0
    %147 = vmatprep.subr.mxu0 0.0
    %148 = vmatpush2.msra.mxu0 0.0
    %149 = vmatprep.subr.mxu0 0.0
    %150 = vmatpush2.msra.mxu0 0.0
    %151 = vmatprep.subr.mxu0 0.0
    %152 = vmatpush2.msra.mxu0 0.0
    %153 = vmatprep.subr.mxu0 0.0
    %154 = vmatpush2.msra.mxu0 0.0
    %155 = vmatprep.subr.mxu0 0.0
    %156 = vmatpush2.msra.mxu0 0.0
    %157 = vmatprep.subr.mxu0 0.0
    %158 = vmatpush2.msra.mxu0 0.0
    %159 = vmatprep.mubr.f32.mxu0 0.0
    %160 = vmatmul.mubr.f32.gmra.mxu0 %v93
    %v161 = vpop.f32.mrf.mxu0
    %v162 = vadd.f32 %v84, %v161
    %v163 = vpop.f32.mrf.mxu0
    %v164 = vadd.f32 %v88, %v163
    %165 = vdwg.mxu0
    %v166 = vtanh.pop %v162
    %v167 = vtanh.pop %v164
    %v168 = vld [vmem:[#allocation8] sm:$0xff]
    %v169 = vld [vmem:[#allocation8 + $0x8] sm:$0xff]
    %v170 = vld [vmem:[#allocation8 + $0x10] sm:$0xff]
    %v171 = vld [vmem:[#allocation8 + $0x18] sm:$0xff]
    %v172 = vld [vmem:[#allocation8 + $0x20] sm:$0xff]
    %v173 = vld [vmem:[#allocation8 + $0x28] sm:$0xff]
    %v174 = vld [vmem:[#allocation8 + $0x30] sm:$0xff]
    %v175 = vld [vmem:[#allocation8 + $0x38] sm:$0xff]
    %v176 = vld [vmem:[#allocation8 + $0x40] sm:$0xff]
    %v177 = vld [vmem:[#allocation8 + $0x48] sm:$0xff]
    %v178 = vld [vmem:[#allocation8 + $0x50] sm:$0xff]
    %v179 = vld [vmem:[#allocation8 + $0x58] sm:$0xff]
    %v180 = vld [vmem:[#allocation8 + $0x60] sm:$0xff]
    %v181 = vld [vmem:[#allocation8 + $0x68] sm:$0xff]
    %v182 = vld [vmem:[#allocation8 + $0x70] sm:$0xff]
    %v183 = vld [vmem:[#allocation8 + $0x78] sm:$0xff]
    %v184 = vld [vmem:[#allocation8 + $0x80] sm:$0xff]
    %v185 = vld [vmem:[#allocation8 + $0x88] sm:$0xff]
    %v186 = vld [vmem:[#allocation8 + $0x90] sm:$0xff]
    %v187 = vld [vmem:[#allocation8 + $0x98] sm:$0xff]
    %v188 = vld [vmem:[#allocation8 + $0xa0] sm:$0xff]
    %v189 = vld [vmem:[#allocation8 + $0xa8] sm:$0xff]
    %v190 = vld [vmem:[#allocation8 + $0xb0] sm:$0xff]
    %v191 = vld [vmem:[#allocation8 + $0xb8] sm:$0xff]
    %v192 = vld [vmem:[#allocation8 + $0xc0] sm:$0xff]
    %v193 = vld [vmem:[#allocation8 + $0xc8] sm:$0xff]
    %v194 = vld [vmem:[#allocation8 + $0xd0] sm:$0xff]
    %v195 = vld [vmem:[#allocation8 + $0xd8] sm:$0xff]
    %v196 = vld [vmem:[#allocation8 + $0xe0] sm:$0xff]
    %v197 = vld [vmem:[#allocation8 + $0xe8] sm:$0xff]
    %v198 = vld [vmem:[#allocation8 + $0xf0] sm:$0xff]
    %v199 = vld [vmem:[#allocation8 + $0xf8] sm:$0xff]
    %v200 = vld [vmem:[#allocation8 + $0x100] sm:$0xff]
    %v201 = vld [vmem:[#allocation8 + $0x108] sm:$0xff]
    %v202 = vld [vmem:[#allocation8 + $0x110] sm:$0xff]
    %v203 = vld [vmem:[#allocation8 + $0x118] sm:$0xff]
    %v204 = vld [vmem:[#allocation8 + $0x120] sm:$0xff]
    %v205 = vld [vmem:[#allocation8 + $0x128] sm:$0xff]
    %v206 = vld [vmem:[#allocation8 + $0x130] sm:$0xff]
    %v207 = vld [vmem:[#allocation8 + $0x138] sm:$0xff]
    %v208 = vld [vmem:[#allocation8 + $0x140] sm:$0xff]
    %v209 = vld [vmem:[#allocation8 + $0x148] sm:$0xff]
    %v210 = vld [vmem:[#allocation8 + $0x150] sm:$0xff]
    %v211 = vld [vmem:[#allocation8 + $0x158] sm:$0xff]
    %v212 = vld [vmem:[#allocation8 + $0x160] sm:$0xff]
    %v213 = vld [vmem:[#allocation8 + $0x168] sm:$0xff]
    %v214 = vld [vmem:[#allocation8 + $0x170] sm:$0xff]
    %v215 = vld [vmem:[#allocation8 + $0x178] sm:$0xff]
    %v216 = vld [vmem:[#allocation8 + $0x180] sm:$0xff]
    %v217 = vld [vmem:[#allocation8 + $0x188] sm:$0xff]
    %v218 = vld [vmem:[#allocation8 + $0x190] sm:$0xff]
    %v219 = vld [vmem:[#allocation8 + $0x198] sm:$0xff]
    %v220 = vld [vmem:[#allocation8 + $0x1a0] sm:$0xff]
    %v221 = vld [vmem:[#allocation8 + $0x1a8] sm:$0xff]
    %v222 = vld [vmem:[#allocation8 + $0x1b0] sm:$0xff]
    %v223 = vld [vmem:[#allocation8 + $0x1b8] sm:$0xff]
    %v224 = vld [vmem:[#allocation8 + $0x1c0] sm:$0xff]
    %v225 = vld [vmem:[#allocation8 + $0x1c8] sm:$0xff]
    %v226 = vld [vmem:[#allocation8 + $0x1d0] sm:$0xff]
    %v227 = vld [vmem:[#allocation8 + $0x1d8] sm:$0xff]
    %v228 = vld [vmem:[#allocation8 + $0x1e0] sm:$0xff]
    %v229 = vld [vmem:[#allocation8 + $0x1e8] sm:$0xff]
    %v230 = vld [vmem:[#allocation8 + $0x1f0] sm:$0xff]
    %v231 = vld [vmem:[#allocation8 + $0x1f8] sm:$0xff]
    %v232 = vld [vmem:[%s4] sm:$0x3]
    %v234 = vlaneseq
    %v235 = vshrl.u32 %v234, 7
    %v236 = vsub.s32 0, %v235
    %v237 = vrot.slane %v232, %v236
    %v238 = vlaneseq
    %v239 = vshrl.u32 %v238, 7
    %v240 = vsub.s32 1, %v239
    %v241 = vrot.slane %v232, %v240
    %244 = vmatprep.subr.mxu0 %v199
    %245 = vmatpush1.msra.mxu0 %v198
    %246 = vmatprep.subr.mxu0 %v197
    %247 = vmatpush1.msra.mxu0 %v196
    %248 = vmatprep.subr.mxu0 %v195
    %249 = vmatpush1.msra.mxu0 %v194
    %250 = vmatprep.subr.mxu0 %v193
    %251 = vmatpush1.msra.mxu0 %v192
    %252 = vmatprep.subr.mxu0 %v191
    %253 = vmatpush1.msra.mxu0 %v190
    %254 = vmatprep.subr.mxu0 %v189
    %255 = vmatpush1.msra.mxu0 %v188
    %256 = vmatprep.subr.mxu0 %v187
    %257 = vmatpush1.msra.mxu0 %v186
    %258 = vmatprep.subr.mxu0 %v185
    %259 = vmatpush1.msra.mxu0 %v184
    %260 = vmatprep.subr.mxu0 %v183
    %261 = vmatpush1.msra.mxu0 %v182
    %262 = vmatprep.subr.mxu0 %v181
    %263 = vmatpush1.msra.mxu0 %v180
    %264 = vmatprep.subr.mxu0 %v179
    %265 = vmatpush1.msra.mxu0 %v178
    %266 = vmatprep.subr.mxu0 %v177
    %267 = vmatpush1.msra.mxu0 %v176
    %268 = vmatprep.subr.mxu0 %v175
    %269 = vmatpush1.msra.mxu0 %v174
    %270 = vmatprep.subr.mxu0 %v173
    %271 = vmatpush1.msra.mxu0 %v172
    %272 = vmatprep.subr.mxu0 %v171
    %273 = vmatpush1.msra.mxu0 %v170
    %274 = vmatprep.subr.mxu0 %v169
    %275 = vmatpush1.msra.mxu0 %v168
    %276 = vmatprep.subr.mxu0 %v231
    %277 = vmatpush2.msra.mxu0 %v230
    %278 = vmatprep.subr.mxu0 %v229
    %279 = vmatpush2.msra.mxu0 %v228
    %280 = vmatprep.subr.mxu0 %v227
    %281 = vmatpush2.msra.mxu0 %v226
    %282 = vmatprep.subr.mxu0 %v225
    %283 = vmatpush2.msra.mxu0 %v224
    %284 = vmatprep.subr.mxu0 %v223
    %285 = vmatpush2.msra.mxu0 %v222
    %286 = vmatprep.subr.mxu0 %v221
    %287 = vmatpush2.msra.mxu0 %v220
    %288 = vmatprep.subr.mxu0 %v219
    %289 = vmatpush2.msra.mxu0 %v218
    %290 = vmatprep.subr.mxu0 %v217
    %291 = vmatpush2.msra.mxu0 %v216
    %292 = vmatprep.subr.mxu0 %v215
    %293 = vmatpush2.msra.mxu0 %v214
    %294 = vmatprep.subr.mxu0 %v213
    %295 = vmatpush2.msra.mxu0 %v212
    %296 = vmatprep.subr.mxu0 %v211
    %297 = vmatpush2.msra.mxu0 %v210
    %298 = vmatprep.subr.mxu0 %v209
    %299 = vmatpush2.msra.mxu0 %v208
    %300 = vmatprep.subr.mxu0 %v207
    %301 = vmatpush2.msra.mxu0 %v206
    %302 = vmatprep.subr.mxu0 %v205
    %303 = vmatpush2.msra.mxu0 %v204
    %304 = vmatprep.subr.mxu0 %v203
    %305 = vmatpush2.msra.mxu0 %v202
    %306 = vmatprep.subr.mxu0 %v201
    %307 = vmatpush2.msra.mxu0 %v200
    %308 = vmatprep.mubr.f32.mxu0 %v167
    %309 = vmatmul.mubr.f32.gmra.mxu0 %v166
    %v310 = vpop.f32.mrf.mxu0
    %v311 = vadd.f32 %v237, %v310
    %v312 = vpop.f32.mrf.mxu0
    %v313 = vadd.f32 %v241, %v312
    %314 = vdwg.mxu0
    %v315 = vtanh.pop %v311
    %v316 = vtanh.pop %v313
    %v317 = vld [vmem:[%s5] sm:$0x1]
    %v319 = vlaneseq
    %v320 = vshrl.u32 %v319, 7
    %v321 = vsub.s32 0, %v320
    %v322 = vrot.slane %v317, %v321
    %v324 = vmul.f32 %v315, %v322
    %325 = vadd.xlane.f32.xlu0 %v324
    %v326 = vpop.xlane.xlu0 %325
    %v327 = vld [vmem:[#allocation2] sm:$0x1]
    %v329 = vlaneseq
    %v330 = vshrl.u32 %v329, 7
    %v331 = vsub.s32 0, %v330
    %v332 = vrot.slane %v327, %v331
    %v334 = vadd.f32 %v326, %v332
    %vm335 = vcmask 7168
    %336 = vst.msk [vmem:[%s7] sm:$0xff] %vm335, %v334
    %337 = vst [vmem:[#allocation9] sm:$0xff] %v316
    // Predicated region
    $region42: #{tpu_custom_call.1} parent=1 // pred_check
      _
    $region43: #{tpu_custom_call.1} parent=1 // pred_check_branch
      %339 = sbr.rel (0) target = $region45
    $region44: #{tpu_custom_call.1} parent=1 // pred_region
      _
    $region45: #{tpu_custom_call.1} parent=1 // pred_fallthru
      _
    // Predicated region
    $region46: #{tpu_custom_call.1} parent=1 // pred_check
      _
    $region47: #{tpu_custom_call.1} parent=1 // pred_check_branch
      %341 = sbr.rel (0) target = $region49
    $region48: #{tpu_custom_call.1} parent=1 // pred_region
      %s343 = ssub.s32 128, 128
      %344 = vsyncadd [#allocation5], %s343
      %s346 = sshll.u32 [#allocation9], 4
      %s347 = int_to_ptr.vmem [resolvable:$true] %s346
      %349 = dma.vmem_to_hbm [thread:$0]  %s347, 128, %s8, [#allocation5]
    $region49: #{tpu_custom_call.1} parent=1 // pred_fallthru
      _
    // Predicated region
    $region50: #{tpu_custom_call.1} parent=1 // pred_check
      _
    $region51: #{tpu_custom_call.1} parent=1 // pred_check_branch
      %351 = sbr.rel (0) target = $region53
    $region52: #{tpu_custom_call.1} parent=1 // pred_region
      _
    $region53: #{tpu_custom_call.1} parent=1 // pred_fallthru
      _
    // Predicated region
    $region54: #{tpu_custom_call.1} parent=1 // pred_check
      _
    $region55: #{tpu_custom_call.1} parent=1 // pred_check_branch
      %353 = sbr.rel (0) target = $region57
    $region56: #{tpu_custom_call.1} parent=1 // pred_region
      %354 = dma.done [#allocation5], 128
    $region57: #{tpu_custom_call.1} parent=1 // pred_fallthru
      _
    %355 = vsyncpa [#allocation4], 1
    %356 = vsyncpa [#allocation7], 1
    %357 = vsyncpa [#allocation5], 1

</llo_original>
